<compile_context>
chip_gen: v7x
topology: tpu7x:2x2x1
jax: 0.10.0
libtpu: 0.0.40
codegen_flags: <defaults>
</compile_context>

<pallas_src>
import functools

import jax
import jax.numpy as jnp
from jax import lax
from jax.experimental import pallas as pl
from jax.experimental.pallas import tpu as pltpu


def _round_up(x, m):
    return ((x + m - 1) // m) * m


def _gem_kernel(x_ref, o_ref, acc_ref, *, p, p_int, inv_p, inv_L, eps,
                L, TL, mask_tail):
    l = pl.program_id(1)
    last_l = pl.num_programs(1) - 1

    @pl.when(l == 0)
    def _init():
        acc_ref[...] = jnp.zeros_like(acc_ref)

    def _accumulate(apply_mask):
        x = x_ref[...].astype(jnp.float32)
        x = jnp.maximum(x, eps)                       # clamp(min=eps)
        if p_int is not None:
            # Integral p (default p=3): pure-VPU multiply chain, no EUP.
            xp = x
            for _ in range(p_int - 1):
                xp = xp * x
        else:
            # Generic positive p; x >= eps > 0 so the exp/log path is safe.
            xp = x ** p
        if apply_mask:
            # Zero the garbage columns of the ragged last L chunk (masking is
            # done *after* the power, so any garbage — even NaN — becomes 0).
            col = l * TL + lax.broadcasted_iota(jnp.int32, xp.shape, 1)
            xp = jnp.where(col < L, xp, 0.0)
        acc_ref[...] += jnp.sum(xp, axis=-1, keepdims=True)   # (TR, 1) f32

    if mask_tail:
        @pl.when(l == last_l)
        def _tail():
            _accumulate(True)

        @pl.when(l < last_l)
        def _body():
            _accumulate(False)
    else:
        _accumulate(False)

    @pl.when(l == last_l)
    def _finalize():
        m = acc_ref[...] * inv_L                      # mean over the true L
        y = m if inv_p == 1.0 else m ** inv_p         # tiny: TR values per tile
        o_ref[...] = y.astype(o_ref.dtype)


def generalized_mean_pooling(x, norm=3.0, eps=1e-6, *, target_block_bytes=None):
    """GeM pooling (output_size=1) over a (B, C, L) input. Returns (B, C, 1)."""
    B, C, L = x.shape
    BC = B * C
    x2d = x.reshape(BC, L)                            # free row-major collapse

    itemsize = jnp.dtype(x.dtype).itemsize
    if target_block_bytes is None:
        # ~8 MiB for 2-byte dtypes (bf16), ~4 MiB for f32: >=85-93% of HBM
        # roofline on v5e/v6e and good overhead-hiding on v7x, while keeping
        # the double-buffered tiles comfortably inside every generation's VMEM.
        target_block_bytes = (8 << 20) if itemsize <= 2 else (4 << 20)

    # (8,128)-aligned tiles sized by bytes.  Keep TL <= 4096 and grow TR
    # instead (small-L GeM shapes would otherwise collapse to tiny blocks).
    TL = min(4096, _round_up(L, 128))
    tr_target = max(8, (target_block_bytes // (TL * itemsize)) // 8 * 8)
    TR = min(tr_target, _round_up(BC, 8))

    num_r = pl.cdiv(BC, TR)
    if num_r < 2 and BC >= 16:
        # Guarantee >=2 row blocks so the "parallel" axis feeds both v7x TCs.
        TR = _round_up(pl.cdiv(BC, 2), 8)
        num_r = pl.cdiv(BC, TR)
    num_l = pl.cdiv(L, TL)
    mask_tail = (L % TL) != 0

    p = float(norm)
    p_int = int(p) if p.is_integer() and p >= 1 else None
    kernel = functools.partial(
        _gem_kernel, p=p, p_int=p_int, inv_p=1.0 / p, inv_L=1.0 / L,
        eps=float(eps), L=L, TL=TL, mask_tail=mask_tail)

    # 8-aligned output rows; rows >= BC (if any) hold garbage and are sliced off.
    out_rows = _round_up(BC, 8)

    # Double-buffered input + headroom for in-kernel f32 intermediates; covers
    # v5e's 16 MiB scoped default and stays under v7x's 64 MiB physical VMEM.
    block_bytes = TR * TL * itemsize
    vmem_limit = int(min(44 << 20, max(32 << 20, 2 * block_bytes + (8 << 20))))

    out = pl.pallas_call(
        kernel,
        out_shape=jax.ShapeDtypeStruct((out_rows, 1), x.dtype),
        grid_spec=pltpu.PrefetchScalarGridSpec(
            num_scalar_prefetch=0,
            grid=(num_r, num_l),                      # reduction axis last
            in_specs=[pl.BlockSpec((TR, TL), lambda r, l: (r, l))],
            out_specs=pl.BlockSpec((TR, 1), lambda r, l: (r, 0)),
            scratch_shapes=[pltpu.VMEM((TR, 1), jnp.float32)],
        ),
        compiler_params=pltpu.CompilerParams(
            dimension_semantics=("parallel", "arbitrary"),
            vmem_limit_bytes=vmem_limit),
    )(x2d)
    return out[:BC].reshape(B, C, 1)


def _reference(x, norm=3.0, eps=1e-6):
    p = float(norm)
    xp = jnp.maximum(x.astype(jnp.float32), eps) ** p
    return (jnp.mean(xp, axis=-1, keepdims=True) ** (1.0 / p)).astype(x.dtype)


if __name__ == "__main__":
    key = jax.random.PRNGKey(0)
    # Small (B, C, L) matching the module's NCL adaptive_avg_pool1d layout.
    # Non-aligned L exercises the ragged last-chunk mask; BC=16 exercises the
    # num_r>=2 split; no wrapper-side padding anywhere.
    B, C, L = 2, 8, 100
    x = jax.random.normal(key, (B, C, L), dtype=jnp.float32)

    # f32, default integral p=3 (multiply-chain path).
    out = jax.block_until_ready(generalized_mean_pooling(x, norm=3.0, eps=1e-6))
    ref = _reference(x, norm=3.0, eps=1e-6)
    assert out.shape == (B, C, 1), out.shape
    assert jnp.allclose(out, ref, atol=1e-5, rtol=1e-5), (
        float(jnp.max(jnp.abs(out - ref))))

    # Non-integral p exercises the generic power path.
    out25 = jax.block_until_ready(generalized_mean_pooling(x, norm=2.5, eps=1e-6))
    ref25 = _reference(x, norm=2.5, eps=1e-6)
    assert jnp.allclose(out25, ref25, atol=1e-5, rtol=1e-5), (
        float(jnp.max(jnp.abs(out25 - ref25))))

    # bf16 input stays bf16 on the HBM side; accumulation/normalization in f32.
    xb = x.astype(jnp.bfloat16)
    outb = jax.block_until_ready(generalized_mean_pooling(xb, norm=3.0, eps=1e-6))
    refb = _reference(xb, norm=3.0, eps=1e-6)
    assert outb.shape == (B, C, 1) and outb.dtype == jnp.bfloat16
    assert jnp.allclose(outb.astype(jnp.float32), refb.astype(jnp.float32),
                        atol=2e-2, rtol=2e-2)

    print("KERNEL_OK")
</pallas_src>

<mosaic_0001>
module attributes {stable_mosaic.version = 11 : i64} {
  func.func @_gem_kernel(%arg0: i32, %arg1: i32, %arg2: memref<8x128xf32, #tpu.memory_space<vmem>>, %arg3: memref<8x1xf32, #tpu.memory_space<vmem>>, %arg4: memref<8x1xf32, #tpu.memory_space<vmem>>) attributes {dimension_semantics = [#tpu.dimension_semantics<parallel>, #tpu.dimension_semantics<arbitrary>], iteration_bounds = array<i64: 2, 1>, scalar_prefetch = 0 : i64, scratch_operands = 1 : i64, tpu.core_type = #tpu.core_type<tc>, window_params = [{transform_indices = @transform_0, window_bounds = array<i64: 8, 128>}, {transform_indices = @transform_1, window_bounds = array<i64: 8, 1>}]} {
    %c0_i32 = arith.constant 0 : i32
    %0 = arith.cmpi eq, %arg1, %c0_i32 : i32
    %1 = arith.extui %0 : i1 to i32
    %c0_i32_0 = arith.constant 0 : i32
    %2 = arith.cmpi ne, %1, %c0_i32_0 : i32
    scf.if %2 {
      %cst = arith.constant 0.000000e+00 : f32
      %12 = vector.broadcast %cst : f32 to vector<8x1xf32>
      %c0 = arith.constant 0 : index
      %c0_7 = arith.constant 0 : index
      %13 = vector.load %arg4[%c0, %c0_7] : memref<8x1xf32, #tpu.memory_space<vmem>>, vector<8x1xf32>
      tpu.vector_store %arg4[%c0, %c0_7], %12 {strides = array<i32>} : memref<8x1xf32, #tpu.memory_space<vmem>>, vector<8x1xf32>,
    } else {
    }
    %c0_i32_1 = arith.constant 0 : i32
    %3 = arith.cmpi eq, %arg1, %c0_i32_1 : i32
    %4 = arith.extui %3 : i1 to i32
    %c0_i32_2 = arith.constant 0 : i32
    %5 = arith.cmpi ne, %4, %c0_i32_2 : i32
    scf.if %5 {
      %c0 = arith.constant 0 : index
      %c0_7 = arith.constant 0 : index
      %12 = vector.load %arg2[%c0, %c0_7] : memref<8x128xf32, #tpu.memory_space<vmem>>, vector<8x128xf32>
      %cst = arith.constant 9.99999997E-7 : f32
      %13 = vector.broadcast %cst : f32 to vector<8x128xf32>
      %14 = arith.maximumf %12, %13 : vector<8x128xf32>
      %15 = arith.mulf %14, %14 : vector<8x128xf32>
      %16 = arith.mulf %15, %14 : vector<8x128xf32>
      %c128_i32 = arith.constant 128 : i32
      %17 = arith.muli %arg1, %c128_i32 : i32
      %18 = tpu.iota {dimensions = array<i32: 1>} : vector<8x128xi32>
      %19 = vector.broadcast %17 : i32 to vector<8x128xi32>
      %20 = arith.addi %19, %18 : vector<8x128xi32>
      %c100_i32 = arith.constant 100 : i32
      %21 = vector.broadcast %c100_i32 : i32 to vector<8x128xi32>
      %22 = arith.cmpi slt, %20, %21 : vector<8x128xi32>
      %cst_8 = arith.constant 0.000000e+00 : f32
      %23 = vector.broadcast %cst_8 : f32 to vector<8x128xf32>
      %24 = arith.select %22, %16, %23 : vector<8x128xi1>, vector<8x128xf32>
      %c0_9 = arith.constant 0 : index
      %c0_10 = arith.constant 0 : index
      %25 = vector.load %arg4[%c0_9, %c0_10] : memref<8x1xf32, #tpu.memory_space<vmem>>, vector<8x1xf32>
      %cst_11 = arith.constant dense<0.000000e+00> : vector<8xf32>
      %26 = vector.multi_reduction <add>, %24, %cst_11 [1] : vector<8x128xf32> to vector<8xf32>
      %27 = vector.shape_cast %26 : vector<8xf32> to vector<8x1xf32>
      %28 = arith.addf %25, %27 : vector<8x1xf32>
      %c0_12 = arith.constant 0 : index
      %c0_13 = arith.constant 0 : index
      %29 = vector.load %arg4[%c0_12, %c0_13] : memref<8x1xf32, #tpu.memory_space<vmem>>, vector<8x1xf32>
      tpu.vector_store %arg4[%c0_12, %c0_13], %28 {strides = array<i32>} : memref<8x1xf32, #tpu.memory_space<vmem>>, vector<8x1xf32>,
    } else {
    }
    %c0_i32_3 = arith.constant 0 : i32
    %6 = arith.cmpi slt, %arg1, %c0_i32_3 : i32
    %7 = arith.extui %6 : i1 to i32
    %c0_i32_4 = arith.constant 0 : i32
    %8 = arith.cmpi ne, %7, %c0_i32_4 : i32
    scf.if %8 {
      %c0 = arith.constant 0 : index
      %c0_7 = arith.constant 0 : index
      %12 = vector.load %arg2[%c0, %c0_7] : memref<8x128xf32, #tpu.memory_space<vmem>>, vector<8x128xf32>
      %cst = arith.constant 9.99999997E-7 : f32
      %13 = vector.broadcast %cst : f32 to vector<8x128xf32>
      %14 = arith.maximumf %12, %13 : vector<8x128xf32>
      %15 = arith.mulf %14, %14 : vector<8x128xf32>
      %16 = arith.mulf %15, %14 : vector<8x128xf32>
      %c0_8 = arith.constant 0 : index
      %c0_9 = arith.constant 0 : index
      %17 = vector.load %arg4[%c0_8, %c0_9] : memref<8x1xf32, #tpu.memory_space<vmem>>, vector<8x1xf32>
      %cst_10 = arith.constant dense<0.000000e+00> : vector<8xf32>
      %18 = vector.multi_reduction <add>, %16, %cst_10 [1] : vector<8x128xf32> to vector<8xf32>
      %19 = vector.shape_cast %18 : vector<8xf32> to vector<8x1xf32>
      %20 = arith.addf %17, %19 : vector<8x1xf32>
      %c0_11 = arith.constant 0 : index
      %c0_12 = arith.constant 0 : index
      %21 = vector.load %arg4[%c0_11, %c0_12] : memref<8x1xf32, #tpu.memory_space<vmem>>, vector<8x1xf32>
      tpu.vector_store %arg4[%c0_11, %c0_12], %20 {strides = array<i32>} : memref<8x1xf32, #tpu.memory_space<vmem>>, vector<8x1xf32>,
    } else {
    }
    %c0_i32_5 = arith.constant 0 : i32
    %9 = arith.cmpi eq, %arg1, %c0_i32_5 : i32
    %10 = arith.extui %9 : i1 to i32
    %c0_i32_6 = arith.constant 0 : i32
    %11 = arith.cmpi ne, %10, %c0_i32_6 : i32
    scf.if %11 {
      %c0 = arith.constant 0 : index
      %c0_7 = arith.constant 0 : index
      %12 = vector.load %arg4[%c0, %c0_7] : memref<8x1xf32, #tpu.memory_space<vmem>>, vector<8x1xf32>
      %cst = arith.constant 0.00999999977 : f32
      %13 = vector.broadcast %cst : f32 to vector<8x1xf32>
      %14 = arith.mulf %12, %13 : vector<8x1xf32>
      %cst_8 = arith.constant 0.333333343 : f32
      %15 = vector.broadcast %cst_8 : f32 to vector<8x1xf32>
      %16 = math.powf %14, %15 : vector<8x1xf32>
      %c0_9 = arith.constant 0 : index
      %c0_10 = arith.constant 0 : index
      %17 = vector.load %arg3[%c0_9, %c0_10] : memref<8x1xf32, #tpu.memory_space<vmem>>, vector<8x1xf32>
      tpu.vector_store %arg3[%c0_9, %c0_10], %16 {strides = array<i32>} : memref<8x1xf32, #tpu.memory_space<vmem>>, vector<8x1xf32>,
    } else {
    }
    return
  }
  func.func @transform_0(%arg0: i32, %arg1: i32) -> (i32, i32) {
    %c0_i32 = arith.constant 0 : i32
    return %arg0, %arg1 : i32, i32
  }
  func.func @transform_1(%arg0: i32, %arg1: i32) -> (i32, i32) {
    %c0_i32 = arith.constant 0 : i32
    %c0_i32_0 = arith.constant 0 : i32
    return %arg0, %c0_i32 : i32, i32
  }
}

</mosaic_0001>

<llo_original>
// kernel: tpu_custom_call.1
$region0: #{tpu_custom_call.1}
  #allocation0 [shape = 'u32[]', space=smem, size = 0x4, offset = 0x4, fixed_abs, tag = 'smem constant byte address 0x4 - core index']
  #allocation1 [shape = 'u32[144,128]{1,0:T(1,128)}', space=vmem, size = 0x12000, scoped, tag = 'internal scratch']
  #allocation2 [shape = 'f32[8,1]{1,0:T(8,128)}', space=vmem, size = 0x1000, scoped, tag = 'scratch operand']
  %s0 = inlined_call_operand.hbm [shape: f32[16,100], index: 0, kind: input, shape index: {}]
  %s1 = inlined_call_operand.vmem [shape: f32[16,1], index: 1, kind: output, shape index: {}]
  %s2 = sld [smem:[#allocation0]]
  $region53: #{tpu_custom_call.1} parent=0
    _
  %s4 = ssub.s32 1, %s2
  %s5 = scalar_select 0, %s4, %s2
  $region1: #{tpu_custom_call.1} parent=0
    #allocation3 [shape = 'u8[8192]{0}', space=vmem, size = 0x2000, scoped, tag = 'input window, operand 0']
    #allocation4 [shape = 's32[2]{0}', space=sflag, size = 0x8, scoped, tag = 'scoped memory for tpu_custom_call.1']
    %6 = vsyncpa [#allocation4], 0
    %s7 = scalar_lea.sflag [#allocation4], 1
    %8 = vsyncpa %s7, 0
    loop: start=0, step=1, limit=4
    $region2: #{tpu_custom_call.1} parent=1 // loop_pre_header
      _
    $region3: #{tpu_custom_call.1} parent=1 // loop_header
      %s10 = sphi 0, %s14
      %p11 = scmp.ge.s32.totalorder %s10, 4
      %s17 = sphi 0, %s29
      %s18 = sphi 0, %s25
      %s19 = sphi 0, %s17
      %s20 = sphi 0, %s18
      %s21 = sphi 0, %s19
      %s22 = sphi 0, %s20
      %s34 = sphi 0, %s36
      %s37 = sphi 0, %s34
      %s38 = sphi 0, %s37
      %s54 = sphi 0, %s38
      %s60 = sphi 0, %s62
      %s63 = sphi 0, %s60
      %s64 = sphi 0, %s63
      %s80 = sphi 0, %s64
    $region4: #{tpu_custom_call.1} parent=1 // loop_header_branch
      %13 = sbr.rel (%p11) target = $region8
    $region5: #{tpu_custom_call.1} parent=1 // loop_body
      %s15 = ssub.s32 %s10, 1
      %s16 = ssub.s32 %s10, 2
      %s23 = sadd.s32 1, %s18
      %p24 = scmp.ge.s32.totalorder %s23, 1
      %s25 = scalar_select %p24, 0, %s23
      %s26 = sadd.s32 1, %s17
      %s27 = scalar_select %p24, %s26, %s17
      %p28 = scmp.ge.s32.totalorder %s27, 2
      %s29 = scalar_select %p28, 0, %s27
      %s30 = ssub.s32 %s17, %s29
      %s31 = ssub.s32 %s18, %s25
      %s32 = sor.u32 %s30, %s31
      %p33 = scmp.eq.s32.totalorder %s32, 0
      %s35 = sadd.s32 %s34, 1
      %s36 = scalar_select %p33, %s34, %s35
      %p39 = pneg %p33
      %p40 = scmp.eq.s32.totalorder %s10, 1
      %p41 = por %p39, %p40
      %p42 = scmp.ne.s32.totalorder %s34, %s37
      %p43 = scmp.eq.s32.totalorder %s10, 0
      %p44 = por %p42, %p43
      %p45 = scmp.ne.s32.totalorder %s34, %s37
      %p46 = scmp.eq.s32.totalorder %s15, 1
      %p47 = por %p45, %p46
      %p48 = scmp.ne.s32.totalorder %s37, %s38
      %p49 = scmp.eq.s32.totalorder %s15, 0
      %p50 = por %p48, %p49
      %p51 = scmp.ne.s32.totalorder %s37, %s38
      %p52 = scmp.eq.s32.totalorder %s16, 1
      %p53 = por %p51, %p52
      %p55 = scmp.ne.s32.totalorder %s38, %s54
      %p56 = scmp.eq.s32.totalorder %s16, 0
      %p57 = por %p55, %p56
      %s58 = ssub.s32 %s17, %s29
      %p59 = scmp.eq.s32.totalorder %s58, 0
      %s61 = sadd.s32 %s60, 1
      %s62 = scalar_select %p59, %s60, %s61
      %p65 = pneg %p59
      %p66 = scmp.eq.s32.totalorder %s10, 1
      %p67 = por %p65, %p66
      %p68 = scmp.ne.s32.totalorder %s60, %s63
      %p69 = scmp.eq.s32.totalorder %s10, 0
      %p70 = por %p68, %p69
      %p71 = scmp.ne.s32.totalorder %s60, %s63
      %p72 = scmp.eq.s32.totalorder %s15, 1
      %p73 = por %p71, %p72
      %p74 = scmp.ne.s32.totalorder %s63, %s64
      %p75 = scmp.eq.s32.totalorder %s15, 0
      %p76 = por %p74, %p75
      %p77 = scmp.ne.s32.totalorder %s63, %s64
      %p78 = scmp.eq.s32.totalorder %s16, 1
      %p79 = por %p77, %p78
      %p81 = scmp.ne.s32.totalorder %s64, %s80
      %p82 = scmp.eq.s32.totalorder %s16, 0
      %p83 = por %p81, %p82
      %p84 = scmp.le.s32.totalorder 1, %s10
      %p85 = scmp.lt.s32.totalorder %s10, 3
      %p86 = pnand %p84, %p85
      %p87 = pneg %p86
      // Predicated region
      $region9: #{tpu_custom_call.1} parent=5 // pred_check
        _
      $region10: #{tpu_custom_call.1} parent=5 // pred_check_branch
        %89 = sbr.rel (%p86) target = $region12
      $region11: #{tpu_custom_call.1} parent=5 // pred_region
        %s90 = ssub.s32 %s10, 1
      $region12: #{tpu_custom_call.1} parent=5 // pred_fallthru
        _
      %p91 = scmp.lt.s32.totalorder %s10, 2
      // Predicated region
      $region13: #{tpu_custom_call.1} parent=5 // pred_check
        %p92 = pneg %p91
      $region14: #{tpu_custom_call.1} parent=5 // pred_check_branch
        %94 = sbr.rel (%p92) target = $region16
      $region15: #{tpu_custom_call.1} parent=5 // pred_region
        // Predicated region
        $region17: #{tpu_custom_call.1} parent=15 // pred_check
          %p95 = pneg %p44
        $region18: #{tpu_custom_call.1} parent=15 // pred_check_branch
          %97 = sbr.rel (%p95) target = $region20
        $region19: #{tpu_custom_call.1} parent=15 // pred_region
          %s98 = sand.u32 %s34, 1
          %s99 = scalar_lea.sflag [#allocation4], %s98
          %s100 = sand.u32 %s34, 1
          %s101 = smul.addr %s100, 8
          %s102 = scalar_lea.vmem [#allocation3], %s101
          %s104 = ssub.s32 128, 128
          %105 = vsyncadd %s99, %s104
          %s106 = sadd.s32 %s18, %s17
          %s107 = smul.addr %s106, 128
          %s108 = scalar_lea.hbm %s0, %s107
          %s110 = sshll.u32 %s102, 4
          %s111 = int_to_ptr.vmem [resolvable:$true] %s110
          %113 = dma.hbm_to_vmem [thread:$0]  %s108, 128, %s111, %s99
        $region20: #{tpu_custom_call.1} parent=15 // pred_fallthru
          _
      $region16: #{tpu_custom_call.1} parent=5 // pred_fallthru
        _
      %p114 = scmp.le.s32.totalorder 1, %s10
      %p115 = scmp.lt.s32.totalorder %s10, 3
      %p116 = pnand %p114, %p115
      %p117 = pneg %p116
      // Predicated region
      $region21: #{tpu_custom_call.1} parent=5 // pred_check
        _
      $region22: #{tpu_custom_call.1} parent=5 // pred_check_branch
        %119 = sbr.rel (%p116) target = $region24
      $region23: #{tpu_custom_call.1} parent=5 // pred_region
        %s120 = ssub.s32 %s10, 1
        %s121 = sand.u32 %s37, 1
        %s122 = scalar_lea.sflag [#allocation4], %s121
        %s123 = sand.u32 %s37, 1
        %s124 = smul.addr %s123, 8
        %s125 = scalar_lea.vmem [#allocation3], %s124
        // Predicated region
        $region25: #{tpu_custom_call.1} parent=23 // pred_check
          %p126 = pneg %p50
        $region26: #{tpu_custom_call.1} parent=23 // pred_check_branch
          %128 = sbr.rel (%p126) target = $region28
        $region27: #{tpu_custom_call.1} parent=23 // pred_region
          %129 = dma.done %s122, 128
        $region28: #{tpu_custom_call.1} parent=23 // pred_fallthru
          _
        %s130 = sand.u32 %s37, 1
        %s131 = scalar_lea.sflag [#allocation4], %s130
        %s132 = sand.u32 %s37, 1
        %s133 = smul.addr %s132, 8
        %s134 = scalar_lea.vmem [#allocation3], %s133
        %p135 = pneg %p50
        %p136 = pneg %p47
        %p137 = pneg %p76
        %p138 = pneg %p73
        %p139 = scmp.lt.s32.totalorder %s19, 1
        %s140 = scalar_select %p139, %s19, 1
        %s141 = smul.addr %s140, 8
        %s142 = scalar_lea.vmem %s1, %s141
        %p143 = scmp.lt.s32.totalorder %s19, 1
        %s144 = scalar_select %p143, %s19, 1
        %s145 = smul.addr %s144, 8
        %s146 = scalar_lea.vmem %s1, %s145
        %p147 = scmp.eq.s32.totalorder %s20, 0
        // Predicated region
        $region29: #{tpu_custom_call.1} parent=23 // pred_check
          %p148 = pneg %p147
        $region30: #{tpu_custom_call.1} parent=23 // pred_check_branch
          %150 = sbr.rel (%p148) target = $region32
        $region31: #{tpu_custom_call.1} parent=23 // pred_region
          %vm151 = vcmask 7168
          %152 = vst.msk [vmem:[#allocation2] sm:$0xff] %vm151, 0.0
          %v153 = vld [vmem:[%s125] sm:$0xff]
          %v154 = vmax.f32 %v153, 1e-06
          %v155 = vmul.f32 %v154, %v154
          %v156 = vmul.f32 %v155, %v154
          %s157 = smul.u32 %s20, 128
          %v158 = vlaneseq
          %v159 = vand.u32 %v158, 127
          %v160 = vstv %s157
          %v161 = vadd.s32 %v160, %v159
          %vm162 = vcmp.lt.s32.totalorder %v161, 100
          %v163 = vsel %vm162, %v156, 0.0
          %v164 = vld [vmem:[#allocation2] sm:$0xff]
          %165 = vadd.xlane.f32.xlu0 %v163
          %v166 = vpop.xlane.xlu0 %165
          %v167 = vadd.f32 %v164, %v166
          %168 = vst.msk [vmem:[#allocation2] sm:$0xff] %vm151, %v167
        $region32: #{tpu_custom_call.1} parent=23 // pred_fallthru
          _
        %p169 = scmp.lt.s32.totalorder %s20, 0
        // Predicated region
        $region33: #{tpu_custom_call.1} parent=23 // pred_check
          %p170 = pneg %p169
        $region34: #{tpu_custom_call.1} parent=23 // pred_check_branch
          %172 = sbr.rel (%p170) target = $region36
        $region35: #{tpu_custom_call.1} parent=23 // pred_region
          %v173 = vld [vmem:[%s125] sm:$0xff]
          %v174 = vmax.f32 %v173, 1e-06
          %v175 = vmul.f32 %v174, %v174
          %v176 = vmul.f32 %v175, %v174
          %v177 = vld [vmem:[#allocation2] sm:$0xff]
          %178 = vadd.xlane.f32.xlu0 %v176
          %v179 = vpop.xlane.xlu0 %178
          %v180 = vadd.f32 %v177, %v179
          %vm181 = vcmask 7168
          %182 = vst.msk [vmem:[#allocation2] sm:$0xff] %vm181, %v180
        $region36: #{tpu_custom_call.1} parent=23 // pred_fallthru
          _
        // Predicated region
        $region37: #{tpu_custom_call.1} parent=23 // pred_check
          %p183 = pneg %p147
        $region38: #{tpu_custom_call.1} parent=23 // pred_check_branch
          %185 = sbr.rel (%p183) target = $region40
        $region39: #{tpu_custom_call.1} parent=23 // pred_region
          %v186 = vld [vmem:[#allocation2] sm:$0xff]
          %v187 = vmul.f32 %v186, 0.01
          %v188 = vpow.f32 %v187, 0.33333334
          %vm189 = vcmask 7168
          %190 = vst.msk [vmem:[%s146] sm:$0xff] %vm189, %v188
        $region40: #{tpu_custom_call.1} parent=23 // pred_fallthru
          _
        %p191 = scmp.lt.s32.totalorder %s19, 1
        %s192 = scalar_select %p191, %s19, 1
        %s193 = smul.addr %s192, 8
        %s194 = scalar_lea.vmem %s1, %s193
        // Predicated region
        $region41: #{tpu_custom_call.1} parent=23 // pred_check
          %p195 = pneg %p73
        $region42: #{tpu_custom_call.1} parent=23 // pred_check_branch
          %197 = sbr.rel (%p195) target = $region44
        $region43: #{tpu_custom_call.1} parent=23 // pred_region
          _
        $region44: #{tpu_custom_call.1} parent=23 // pred_fallthru
          _
      $region24: #{tpu_custom_call.1} parent=5 // pred_fallthru
        _
      %p198 = scmp.le.s32.totalorder 2, %s10
      // Predicated region
      $region45: #{tpu_custom_call.1} parent=5 // pred_check
        %p199 = pneg %p198
      $region46: #{tpu_custom_call.1} parent=5 // pred_check_branch
        %201 = sbr.rel (%p199) target = $region48
      $region47: #{tpu_custom_call.1} parent=5 // pred_region
        %s202 = ssub.s32 %s10, 2
        // Predicated region
        $region49: #{tpu_custom_call.1} parent=47 // pred_check
          %p203 = pneg %p79
        $region50: #{tpu_custom_call.1} parent=47 // pred_check_branch
          %205 = sbr.rel (%p203) target = $region52
        $region51: #{tpu_custom_call.1} parent=47 // pred_region
          %p206 = scmp.lt.s32.totalorder %s21, 1
          %s207 = scalar_select %p206, %s21, 1
          %s208 = smul.addr %s207, 8
          %s209 = scalar_lea.vmem %s1, %s208
        $region52: #{tpu_custom_call.1} parent=47 // pred_fallthru
          _
      $region48: #{tpu_custom_call.1} parent=5 // pred_fallthru
        _
    $region6: #{tpu_custom_call.1} parent=1 // loop_footer
      %s14 = sadd.s32 1, %s10
    $region7: #{tpu_custom_call.1} parent=1 // loop_footer_branch
      %9 = sbr.rel target = $region3
    $region8: #{tpu_custom_call.1} parent=1 // loop_exit
      _
    %210 = vsyncpa [#allocation4], 1
    %s211 = scalar_lea.sflag [#allocation4], 1
    %212 = vsyncpa %s211, 1

</llo_original>
